<compile_context>
chip_gen: v5e
topology: v5e:2x2
jax: 0.10.0
libtpu: 0.0.40
codegen_flags: <defaults>
</compile_context>

<pallas_src>
import functools
import math

import jax
import jax.numpy as jnp
from jax.experimental import pallas as pl
from jax.experimental.pallas import tpu as pltpu


def rnn_fused_kernel(x_ref, h0_ref, w_ih_t_ref, w_hh_t_ref, b_rnn_ref,
                     w_d_t_ref, b_d_ref, out_ref, xproj_scr, h_all_scr, *,
                     batch_pad, seq_len, mxu_dtype):
    """Fused RNN forward:
       batched input projection -> serial tanh recurrence -> batched dense.

    All arrays arrive pre-padded (rows multiple of 8, feature dims multiple
    of 128) and time-major (row index = t * batch_pad + b).

    x_ref     : (T*Bp, Vp)   all timesteps, time-major rows
    h0_ref    : (Bp, Hp)     initial hidden state
    w_ih_t_ref: (Vp, Hp)     input->hidden weight, pre-transposed
    w_hh_t_ref: (Hp, Hp)     hidden->hidden weight, pre-transposed
    b_rnn_ref : (1, Hp)      b_ih + b_hh (pre-summed)
    w_d_t_ref : (Hp, Cp)     dense weight, pre-transposed
    b_d_ref   : (1, Cp)
    out_ref   : (T*Bp, Cp)   logits slab (single lane-dense, unmasked store)
    xproj_scr : (T*Bp, Hp)   f32 VMEM scratch, staged input projection
    h_all_scr : (T*Bp, Hp)   f32 VMEM scratch, every hidden state
    """
    cast = lambda v: v if v.dtype == mxu_dtype else v.astype(mxu_dtype)

    # (1) Input projection for ALL timesteps as one large MXU matmul, staged
    #     into time-major VMEM scratch (bias added once here).
    xproj_scr[...] = (
        jnp.dot(cast(x_ref[...]), cast(w_ih_t_ref[...]),
                preferred_element_type=jnp.float32)
        + b_rnn_ref[...])

    # (2) Serial recurrence: only h @ W_hh^T stays on the latency chain.
    #     W_hh cast hoisted out of the loop; h carried in vregs (f32).
    w_hh_t = cast(w_hh_t_ref[...])

    def step(t, h):
        row = pl.multiple_of(t * batch_pad, batch_pad)
        pre = xproj_scr[pl.ds(row, batch_pad), :] + jnp.dot(
            cast(h), w_hh_t, preferred_element_type=jnp.float32)
        h_new = jnp.tanh(pre)                         # f32 VPU/EUP
        h_all_scr[pl.ds(row, batch_pad), :] = h_new   # full (Bp,Hp) unmasked
        return h_new

    jax.lax.fori_loop(0, seq_len, step, h0_ref[...].astype(jnp.float32),
                      unroll=min(8, seq_len))

    # (3) Dense projection for ALL timesteps as one MXU matmul + one
    #     lane-dense unmasked store of the whole logits slab.
    logits = (jnp.dot(cast(h_all_scr[...]), cast(w_d_t_ref[...]),
                      preferred_element_type=jnp.float32)
              + b_d_ref[...])
    out_ref[...] = logits.astype(out_ref.dtype)


def _round_up(n, m):
    return ((n + m - 1) // m) * m


@functools.partial(jax.jit, static_argnames=("mxu_dtype",))
def rnn_model_forward(inputs, state, w_ih, w_hh, b_ih, b_hh, w_dense, b_dense,
                      mxu_dtype=jnp.float32):
    """Equivalent of RNNModel.forward(inputs, state).

    inputs : (B, T, V) float32  (batch_first)
    state  : (1, B, H) float32  (nn.RNN hidden state, num_layers=1)
    returns (state, outputs) with outputs (B, T, vocab).  Like the PyTorch
    module, the *input* state is returned (new state only goes to self.state).
    """
    B, T, V = inputs.shape
    H = w_hh.shape[0]
    vocab = w_dense.shape[0]

    LANE, SUB = 128, 8
    B_pad = _round_up(B, SUB)
    V_pad = _round_up(V, LANE)
    H_pad = _round_up(H, LANE)
    C_pad = _round_up(vocab, LANE)

    # Wrapper-side (off the serial path) padding + time-major relayout.
    # Zero padding keeps the real hidden channels exact: padded V columns /
    # W rows are zero, padded H channels stay at tanh(0)=0, padded batch rows
    # are discarded at the end.
    x = jnp.pad(inputs, ((0, B_pad - B), (0, 0), (0, V_pad - V)))
    x2d = jnp.transpose(x, (1, 0, 2)).reshape(T * B_pad, V_pad)

    h0 = jnp.pad(state[0], ((0, B_pad - B), (0, H_pad - H)))
    w_ih_t = jnp.pad(w_ih.T, ((0, V_pad - V), (0, H_pad - H)))
    w_hh_t = jnp.pad(w_hh.T, ((0, H_pad - H), (0, H_pad - H)))
    w_d_t = jnp.pad(w_dense.T, ((0, H_pad - H), (0, C_pad - vocab)))
    b_rnn = jnp.pad(b_ih + b_hh, (0, H_pad - H)).reshape(1, H_pad)
    b_d = jnp.pad(b_dense, (0, C_pad - vocab)).reshape(1, C_pad)

    rows = T * B_pad
    flops = 2 * rows * (V_pad * H_pad + H_pad * H_pad + H_pad * C_pad)
    bytes_accessed = 4 * (rows * V_pad + B_pad * H_pad + V_pad * H_pad
                          + H_pad * H_pad + H_pad * C_pad + H_pad + C_pad
                          + rows * C_pad)

    vmem = pl.BlockSpec(memory_space=pltpu.MemorySpace.VMEM)
    out2d = pl.pallas_call(
        functools.partial(rnn_fused_kernel, batch_pad=B_pad, seq_len=T,
                          mxu_dtype=mxu_dtype),
        out_shape=jax.ShapeDtypeStruct((rows, C_pad), jnp.float32),
        in_specs=[vmem] * 7,
        out_specs=vmem,
        scratch_shapes=[pltpu.VMEM((rows, H_pad), jnp.float32),   # xproj
                        pltpu.VMEM((rows, H_pad), jnp.float32)],  # h_all
        compiler_params=pltpu.CompilerParams(
            vmem_limit_bytes=32 * 1024 * 1024),
        cost_estimate=pl.CostEstimate(
            flops=flops,
            transcendentals=rows * H_pad,           # tanh
            bytes_accessed=bytes_accessed),
    )(x2d, h0, w_ih_t, w_hh_t, b_rnn, w_d_t, b_d)

    outputs = (out2d.reshape(T, B_pad, C_pad)
               .transpose(1, 0, 2)[:B, :, :vocab])
    return state, outputs


def init_params(key, input_size, hidden_size, vocab_size):
    """Deterministic init matching PyTorch default shapes/distributions."""
    k = jax.random.split(key, 6)
    bound = 1.0 / math.sqrt(hidden_size)
    w_ih = jax.random.uniform(k[0], (hidden_size, input_size),
                              minval=-bound, maxval=bound, dtype=jnp.float32)
    w_hh = jax.random.uniform(k[1], (hidden_size, hidden_size),
                              minval=-bound, maxval=bound, dtype=jnp.float32)
    b_ih = jax.random.uniform(k[2], (hidden_size,),
                              minval=-bound, maxval=bound, dtype=jnp.float32)
    b_hh = jax.random.uniform(k[3], (hidden_size,),
                              minval=-bound, maxval=bound, dtype=jnp.float32)
    w_dense = jax.random.uniform(k[4], (vocab_size, hidden_size),
                                 minval=-bound, maxval=bound, dtype=jnp.float32)
    b_dense = jax.random.uniform(k[5], (vocab_size,),
                                 minval=-bound, maxval=bound, dtype=jnp.float32)
    return w_ih, w_hh, b_ih, b_hh, w_dense, b_dense


if __name__ == "__main__":
    # Small shapes consistent with the module (char-RNN style usage).
    B, T = 2, 8
    vocab_size = 32           # vocab == RNN input feature size (typical usage)
    input_size = vocab_size
    hidden_size = 32

    key = jax.random.PRNGKey(0)
    k_param, k_x, k_h = jax.random.split(key, 3)

    w_ih, w_hh, b_ih, b_hh, w_dense, b_dense = init_params(
        k_param, input_size, hidden_size, vocab_size)

    inputs = jax.random.normal(k_x, (B, T, input_size), dtype=jnp.float32)
    state = jax.random.normal(k_h, (1, B, hidden_size), dtype=jnp.float32)

    ret_state, outputs = rnn_model_forward(
        inputs, state, w_ih, w_hh, b_ih, b_hh, w_dense, b_dense)
    jax.block_until_ready((ret_state, outputs))

    assert ret_state.shape == (1, B, hidden_size)
    assert outputs.shape == (B, T, vocab_size)

    # Pure-JAX reference: recurrence + per-timestep dense projection.
    def ref_forward(x, h0):
        h = h0[0]
        outs = []
        for t in range(x.shape[1]):
            h = jnp.tanh(x[:, t, :] @ w_ih.T + b_ih + h @ w_hh.T + b_hh)
            outs.append(h @ w_dense.T + b_dense)
        return jnp.stack(outs, axis=1)

    ref = ref_forward(inputs, state)
    assert jnp.allclose(outputs, ref, atol=1e-5, rtol=1e-5)
    assert jnp.allclose(ret_state, state)

    print("KERNEL_OK")
</pallas_src>

<mosaic_0001>
module attributes {stable_mosaic.version = 11 : i64} {
  func.func @rnn_fused_kernel(%arg0: memref<64x128xf32, #tpu.memory_space<vmem>>, %arg1: memref<8x128xf32, #tpu.memory_space<vmem>>, %arg2: memref<128x128xf32, #tpu.memory_space<vmem>>, %arg3: memref<128x128xf32, #tpu.memory_space<vmem>>, %arg4: memref<1x128xf32, #tpu.memory_space<vmem>>, %arg5: memref<128x128xf32, #tpu.memory_space<vmem>>, %arg6: memref<1x128xf32, #tpu.memory_space<vmem>>, %arg7: memref<64x128xf32, #tpu.memory_space<vmem>>, %arg8: memref<64x128xf32, #tpu.memory_space<vmem>>, %arg9: memref<64x128xf32, #tpu.memory_space<vmem>>) attributes {dimension_semantics = [], scalar_prefetch = 0 : i64, scratch_operands = 2 : i64, tpu.core_type = #tpu.core_type<tc>} {
    %c0 = arith.constant 0 : index
    %c0_0 = arith.constant 0 : index
    %0 = vector.load %arg0[%c0, %c0_0] : memref<64x128xf32, #tpu.memory_space<vmem>>, vector<64x128xf32>
    %c0_1 = arith.constant 0 : index
    %c0_2 = arith.constant 0 : index
    %1 = vector.load %arg2[%c0_1, %c0_2] : memref<128x128xf32, #tpu.memory_space<vmem>>, vector<128x128xf32>
    %cst = arith.constant dense<0.000000e+00> : vector<64x128xf32>
    %2 = tpu.matmul %0, %1, %cst {dimension_numbers = #tpu.dot_dimension_numbers<[1], [0], [0], [1], [0, 0, 1, 1], [], []>} : vector<64x128xf32>, vector<128x128xf32>, vector<64x128xf32> -> vector<64x128xf32>
    %c0_3 = arith.constant 0 : index
    %c0_4 = arith.constant 0 : index
    %3 = vector.load %arg4[%c0_3, %c0_4] : memref<1x128xf32, #tpu.memory_space<vmem>>, vector<1x128xf32>
    %4 = vector.broadcast %3 : vector<1x128xf32> to vector<64x128xf32>
    %5 = arith.addf %2, %4 : vector<64x128xf32>
    %c0_5 = arith.constant 0 : index
    %c0_6 = arith.constant 0 : index
    %6 = vector.load %arg8[%c0_5, %c0_6] : memref<64x128xf32, #tpu.memory_space<vmem>>, vector<64x128xf32>
    tpu.vector_store %arg8[%c0_5, %c0_6], %5 {strides = array<i32>} : memref<64x128xf32, #tpu.memory_space<vmem>>, vector<64x128xf32>,
    %c0_7 = arith.constant 0 : index
    %c0_8 = arith.constant 0 : index
    %7 = vector.load %arg3[%c0_7, %c0_8] : memref<128x128xf32, #tpu.memory_space<vmem>>, vector<128x128xf32>
    %c0_9 = arith.constant 0 : index
    %c0_10 = arith.constant 0 : index
    %8 = vector.load %arg1[%c0_9, %c0_10] : memref<8x128xf32, #tpu.memory_space<vmem>>, vector<8x128xf32>
    %c0_i32 = arith.constant 0 : i32
    %c8_i32 = arith.constant 8 : i32
    %9 = arith.muli %c0_i32, %c8_i32 : i32
    %10 = tpu.assume_multiple %9, 8 : i32
    %11 = arith.index_cast %10 : i32 to index
    %c0_11 = arith.constant 0 : index
    %12 = vector.load %arg8[%11, %c0_11] : memref<64x128xf32, #tpu.memory_space<vmem>>, vector<8x128xf32>
    %cst_12 = arith.constant dense<0.000000e+00> : vector<8x128xf32>
    %13 = tpu.matmul %8, %7, %cst_12 {dimension_numbers = #tpu.dot_dimension_numbers<[1], [0], [0], [1], [0, 0, 1, 1], [], []>} : vector<8x128xf32>, vector<128x128xf32>, vector<8x128xf32> -> vector<8x128xf32>
    %14 = arith.addf %12, %13 : vector<8x128xf32>
    %15 = math.tanh %14 : vector<8x128xf32>
    %16 = arith.index_cast %10 : i32 to index
    %c0_13 = arith.constant 0 : index
    %17 = vector.load %arg9[%16, %c0_13] : memref<64x128xf32, #tpu.memory_space<vmem>>, vector<8x128xf32>
    tpu.vector_store %arg9[%16, %c0_13], %15 {strides = array<i32>} : memref<64x128xf32, #tpu.memory_space<vmem>>, vector<8x128xf32>,
    %c1_i32 = arith.constant 1 : i32
    %c8_i32_14 = arith.constant 8 : i32
    %18 = arith.muli %c1_i32, %c8_i32_14 : i32
    %19 = tpu.assume_multiple %18, 8 : i32
    %20 = arith.index_cast %19 : i32 to index
    %c0_15 = arith.constant 0 : index
    %21 = vector.load %arg8[%20, %c0_15] : memref<64x128xf32, #tpu.memory_space<vmem>>, vector<8x128xf32>
    %cst_16 = arith.constant dense<0.000000e+00> : vector<8x128xf32>
    %22 = tpu.matmul %15, %7, %cst_16 {dimension_numbers = #tpu.dot_dimension_numbers<[1], [0], [0], [1], [0, 0, 1, 1], [], []>} : vector<8x128xf32>, vector<128x128xf32>, vector<8x128xf32> -> vector<8x128xf32>
    %23 = arith.addf %21, %22 : vector<8x128xf32>
    %24 = math.tanh %23 : vector<8x128xf32>
    %25 = arith.index_cast %19 : i32 to index
    %c0_17 = arith.constant 0 : index
    %26 = vector.load %arg9[%25, %c0_17] : memref<64x128xf32, #tpu.memory_space<vmem>>, vector<8x128xf32>
    tpu.vector_store %arg9[%25, %c0_17], %24 {strides = array<i32>} : memref<64x128xf32, #tpu.memory_space<vmem>>, vector<8x128xf32>,
    %c2_i32 = arith.constant 2 : i32
    %c8_i32_18 = arith.constant 8 : i32
    %27 = arith.muli %c2_i32, %c8_i32_18 : i32
    %28 = tpu.assume_multiple %27, 8 : i32
    %29 = arith.index_cast %28 : i32 to index
    %c0_19 = arith.constant 0 : index
    %30 = vector.load %arg8[%29, %c0_19] : memref<64x128xf32, #tpu.memory_space<vmem>>, vector<8x128xf32>
    %cst_20 = arith.constant dense<0.000000e+00> : vector<8x128xf32>
    %31 = tpu.matmul %24, %7, %cst_20 {dimension_numbers = #tpu.dot_dimension_numbers<[1], [0], [0], [1], [0, 0, 1, 1], [], []>} : vector<8x128xf32>, vector<128x128xf32>, vector<8x128xf32> -> vector<8x128xf32>
    %32 = arith.addf %30, %31 : vector<8x128xf32>
    %33 = math.tanh %32 : vector<8x128xf32>
    %34 = arith.index_cast %28 : i32 to index
    %c0_21 = arith.constant 0 : index
    %35 = vector.load %arg9[%34, %c0_21] : memref<64x128xf32, #tpu.memory_space<vmem>>, vector<8x128xf32>
    tpu.vector_store %arg9[%34, %c0_21], %33 {strides = array<i32>} : memref<64x128xf32, #tpu.memory_space<vmem>>, vector<8x128xf32>,
    %c3_i32 = arith.constant 3 : i32
    %c8_i32_22 = arith.constant 8 : i32
    %36 = arith.muli %c3_i32, %c8_i32_22 : i32
    %37 = tpu.assume_multiple %36, 8 : i32
    %38 = arith.index_cast %37 : i32 to index
    %c0_23 = arith.constant 0 : index
    %39 = vector.load %arg8[%38, %c0_23] : memref<64x128xf32, #tpu.memory_space<vmem>>, vector<8x128xf32>
    %cst_24 = arith.constant dense<0.000000e+00> : vector<8x128xf32>
    %40 = tpu.matmul %33, %7, %cst_24 {dimension_numbers = #tpu.dot_dimension_numbers<[1], [0], [0], [1], [0, 0, 1, 1], [], []>} : vector<8x128xf32>, vector<128x128xf32>, vector<8x128xf32> -> vector<8x128xf32>
    %41 = arith.addf %39, %40 : vector<8x128xf32>
    %42 = math.tanh %41 : vector<8x128xf32>
    %43 = arith.index_cast %37 : i32 to index
    %c0_25 = arith.constant 0 : index
    %44 = vector.load %arg9[%43, %c0_25] : memref<64x128xf32, #tpu.memory_space<vmem>>, vector<8x128xf32>
    tpu.vector_store %arg9[%43, %c0_25], %42 {strides = array<i32>} : memref<64x128xf32, #tpu.memory_space<vmem>>, vector<8x128xf32>,
    %c4_i32 = arith.constant 4 : i32
    %c8_i32_26 = arith.constant 8 : i32
    %45 = arith.muli %c4_i32, %c8_i32_26 : i32
    %46 = tpu.assume_multiple %45, 8 : i32
    %47 = arith.index_cast %46 : i32 to index
    %c0_27 = arith.constant 0 : index
    %48 = vector.load %arg8[%47, %c0_27] : memref<64x128xf32, #tpu.memory_space<vmem>>, vector<8x128xf32>
    %cst_28 = arith.constant dense<0.000000e+00> : vector<8x128xf32>
    %49 = tpu.matmul %42, %7, %cst_28 {dimension_numbers = #tpu.dot_dimension_numbers<[1], [0], [0], [1], [0, 0, 1, 1], [], []>} : vector<8x128xf32>, vector<128x128xf32>, vector<8x128xf32> -> vector<8x128xf32>
    %50 = arith.addf %48, %49 : vector<8x128xf32>
    %51 = math.tanh %50 : vector<8x128xf32>
    %52 = arith.index_cast %46 : i32 to index
    %c0_29 = arith.constant 0 : index
    %53 = vector.load %arg9[%52, %c0_29] : memref<64x128xf32, #tpu.memory_space<vmem>>, vector<8x128xf32>
    tpu.vector_store %arg9[%52, %c0_29], %51 {strides = array<i32>} : memref<64x128xf32, #tpu.memory_space<vmem>>, vector<8x128xf32>,
    %c5_i32 = arith.constant 5 : i32
    %c8_i32_30 = arith.constant 8 : i32
    %54 = arith.muli %c5_i32, %c8_i32_30 : i32
    %55 = tpu.assume_multiple %54, 8 : i32
    %56 = arith.index_cast %55 : i32 to index
    %c0_31 = arith.constant 0 : index
    %57 = vector.load %arg8[%56, %c0_31] : memref<64x128xf32, #tpu.memory_space<vmem>>, vector<8x128xf32>
    %cst_32 = arith.constant dense<0.000000e+00> : vector<8x128xf32>
    %58 = tpu.matmul %51, %7, %cst_32 {dimension_numbers = #tpu.dot_dimension_numbers<[1], [0], [0], [1], [0, 0, 1, 1], [], []>} : vector<8x128xf32>, vector<128x128xf32>, vector<8x128xf32> -> vector<8x128xf32>
    %59 = arith.addf %57, %58 : vector<8x128xf32>
    %60 = math.tanh %59 : vector<8x128xf32>
    %61 = arith.index_cast %55 : i32 to index
    %c0_33 = arith.constant 0 : index
    %62 = vector.load %arg9[%61, %c0_33] : memref<64x128xf32, #tpu.memory_space<vmem>>, vector<8x128xf32>
    tpu.vector_store %arg9[%61, %c0_33], %60 {strides = array<i32>} : memref<64x128xf32, #tpu.memory_space<vmem>>, vector<8x128xf32>,
    %c6_i32 = arith.constant 6 : i32
    %c8_i32_34 = arith.constant 8 : i32
    %63 = arith.muli %c6_i32, %c8_i32_34 : i32
    %64 = tpu.assume_multiple %63, 8 : i32
    %65 = arith.index_cast %64 : i32 to index
    %c0_35 = arith.constant 0 : index
    %66 = vector.load %arg8[%65, %c0_35] : memref<64x128xf32, #tpu.memory_space<vmem>>, vector<8x128xf32>
    %cst_36 = arith.constant dense<0.000000e+00> : vector<8x128xf32>
    %67 = tpu.matmul %60, %7, %cst_36 {dimension_numbers = #tpu.dot_dimension_numbers<[1], [0], [0], [1], [0, 0, 1, 1], [], []>} : vector<8x128xf32>, vector<128x128xf32>, vector<8x128xf32> -> vector<8x128xf32>
    %68 = arith.addf %66, %67 : vector<8x128xf32>
    %69 = math.tanh %68 : vector<8x128xf32>
    %70 = arith.index_cast %64 : i32 to index
    %c0_37 = arith.constant 0 : index
    %71 = vector.load %arg9[%70, %c0_37] : memref<64x128xf32, #tpu.memory_space<vmem>>, vector<8x128xf32>
    tpu.vector_store %arg9[%70, %c0_37], %69 {strides = array<i32>} : memref<64x128xf32, #tpu.memory_space<vmem>>, vector<8x128xf32>,
    %c7_i32 = arith.constant 7 : i32
    %c8_i32_38 = arith.constant 8 : i32
    %72 = arith.muli %c7_i32, %c8_i32_38 : i32
    %73 = tpu.assume_multiple %72, 8 : i32
    %74 = arith.index_cast %73 : i32 to index
    %c0_39 = arith.constant 0 : index
    %75 = vector.load %arg8[%74, %c0_39] : memref<64x128xf32, #tpu.memory_space<vmem>>, vector<8x128xf32>
    %cst_40 = arith.constant dense<0.000000e+00> : vector<8x128xf32>
    %76 = tpu.matmul %69, %7, %cst_40 {dimension_numbers = #tpu.dot_dimension_numbers<[1], [0], [0], [1], [0, 0, 1, 1], [], []>} : vector<8x128xf32>, vector<128x128xf32>, vector<8x128xf32> -> vector<8x128xf32>
    %77 = arith.addf %75, %76 : vector<8x128xf32>
    %78 = math.tanh %77 : vector<8x128xf32>
    %79 = arith.index_cast %73 : i32 to index
    %c0_41 = arith.constant 0 : index
    %80 = vector.load %arg9[%79, %c0_41] : memref<64x128xf32, #tpu.memory_space<vmem>>, vector<8x128xf32>
    tpu.vector_store %arg9[%79, %c0_41], %78 {strides = array<i32>} : memref<64x128xf32, #tpu.memory_space<vmem>>, vector<8x128xf32>,
    %c8_i32_42 = arith.constant 8 : i32
    %c0_43 = arith.constant 0 : index
    %c0_44 = arith.constant 0 : index
    %81 = vector.load %arg9[%c0_43, %c0_44] : memref<64x128xf32, #tpu.memory_space<vmem>>, vector<64x128xf32>
    %c0_45 = arith.constant 0 : index
    %c0_46 = arith.constant 0 : index
    %82 = vector.load %arg5[%c0_45, %c0_46] : memref<128x128xf32, #tpu.memory_space<vmem>>, vector<128x128xf32>
    %cst_47 = arith.constant dense<0.000000e+00> : vector<64x128xf32>
    %83 = tpu.matmul %81, %82, %cst_47 {dimension_numbers = #tpu.dot_dimension_numbers<[1], [0], [0], [1], [0, 0, 1, 1], [], []>} : vector<64x128xf32>, vector<128x128xf32>, vector<64x128xf32> -> vector<64x128xf32>
    %c0_48 = arith.constant 0 : index
    %c0_49 = arith.constant 0 : index
    %84 = vector.load %arg6[%c0_48, %c0_49] : memref<1x128xf32, #tpu.memory_space<vmem>>, vector<1x128xf32>
    %85 = vector.broadcast %84 : vector<1x128xf32> to vector<64x128xf32>
    %86 = arith.addf %83, %85 : vector<64x128xf32>
    %c0_50 = arith.constant 0 : index
    %c0_51 = arith.constant 0 : index
    %87 = vector.load %arg7[%c0_50, %c0_51] : memref<64x128xf32, #tpu.memory_space<vmem>>, vector<64x128xf32>
    tpu.vector_store %arg7[%c0_50, %c0_51], %86 {strides = array<i32>} : memref<64x128xf32, #tpu.memory_space<vmem>>, vector<64x128xf32>,
    return
  }
}

</mosaic_0001>

<llo_original>
// kernel: rnn_model_forward.1
$region0: #{rnn_model_forward.1}
  #allocation0 [shape = 'u32[]', space=smem, size = 0x4, offset = 0x4, fixed_abs, tag = 'smem constant byte address 0x4 - core index']
  #allocation1 [shape = 'u32[72,128]{1,0:T(1,128)}', space=vmem, size = 0x9000, scoped, tag = 'internal scratch']
  #allocation2 [shape = 'f32[64,128]{1,0:T(8,128)}', space=vmem, size = 0x8000, scoped, tag = 'scratch operand']
  #allocation3 [shape = 'f32[64,128]{1,0:T(8,128)}', space=vmem, size = 0x8000, scoped, tag = 'scratch operand']
  %s0 = inlined_call_operand.vmem [shape: f32[64,128], index: 0, kind: input, shape index: {}]
  %s1 = inlined_call_operand.vmem [shape: f32[8,128], index: 1, kind: input, shape index: {}]
  %s2 = inlined_call_operand.vmem [shape: f32[128,128], index: 2, kind: input, shape index: {}]
  %s3 = inlined_call_operand.vmem [shape: f32[128,128], index: 3, kind: input, shape index: {}]
  %s4 = inlined_call_operand.vmem [shape: f32[1,128], index: 4, kind: input, shape index: {}]
  %s5 = inlined_call_operand.vmem [shape: f32[128,128], index: 5, kind: input, shape index: {}]
  %s6 = inlined_call_operand.vmem [shape: f32[1,128], index: 6, kind: input, shape index: {}]
  %s7 = inlined_call_operand.vmem [shape: f32[64,128], index: 7, kind: output, shape index: {}]
  %s8 = sld [smem:[#allocation0]]
  $region38: #{rnn_model_forward.1} parent=0
    _
  %s10 = ssub.s32 1, %s8
  %s11 = scalar_select 0, %s10, %s8
  // Predicated region
  $region2: #{rnn_model_forward.1} parent=0 // pred_check
    _
  $region3: #{rnn_model_forward.1} parent=0 // pred_check_branch
    %13 = sbr.rel (0) target = $region5
  $region4: #{rnn_model_forward.1} parent=0 // pred_region
    _
  $region5: #{rnn_model_forward.1} parent=0 // pred_fallthru
    _
  // Predicated region
  $region6: #{rnn_model_forward.1} parent=0 // pred_check
    _
  $region7: #{rnn_model_forward.1} parent=0 // pred_check_branch
    %15 = sbr.rel (0) target = $region9
  $region8: #{rnn_model_forward.1} parent=0 // pred_region
    _
  $region9: #{rnn_model_forward.1} parent=0 // pred_fallthru
    _
  // Predicated region
  $region10: #{rnn_model_forward.1} parent=0 // pred_check
    _
  $region11: #{rnn_model_forward.1} parent=0 // pred_check_branch
    %17 = sbr.rel (0) target = $region13
  $region12: #{rnn_model_forward.1} parent=0 // pred_region
    _
  $region13: #{rnn_model_forward.1} parent=0 // pred_fallthru
    _
  // Predicated region
  $region14: #{rnn_model_forward.1} parent=0 // pred_check
    _
  $region15: #{rnn_model_forward.1} parent=0 // pred_check_branch
    %19 = sbr.rel (0) target = $region17
  $region16: #{rnn_model_forward.1} parent=0 // pred_region
    _
  $region17: #{rnn_model_forward.1} parent=0 // pred_fallthru
    _
  // Predicated region
  $region18: #{rnn_model_forward.1} parent=0 // pred_check
    _
  $region19: #{rnn_model_forward.1} parent=0 // pred_check_branch
    %21 = sbr.rel (0) target = $region21
  $region20: #{rnn_model_forward.1} parent=0 // pred_region
    _
  $region21: #{rnn_model_forward.1} parent=0 // pred_fallthru
    _
  // Predicated region
  $region22: #{rnn_model_forward.1} parent=0 // pred_check
    _
  $region23: #{rnn_model_forward.1} parent=0 // pred_check_branch
    %23 = sbr.rel (0) target = $region25
  $region24: #{rnn_model_forward.1} parent=0 // pred_region
    _
  $region25: #{rnn_model_forward.1} parent=0 // pred_fallthru
    _
  // Predicated region
  $region26: #{rnn_model_forward.1} parent=0 // pred_check
    _
  $region27: #{rnn_model_forward.1} parent=0 // pred_check_branch
    %25 = sbr.rel (0) target = $region29
  $region28: #{rnn_model_forward.1} parent=0 // pred_region
    _
  $region29: #{rnn_model_forward.1} parent=0 // pred_fallthru
    _
  %v26 = vld [vmem:[%s0] sm:$0xff]
  %v27 = vld [vmem:[%s0 + $0x8] sm:$0xff]
  %v28 = vld [vmem:[%s0 + $0x10] sm:$0xff]
  %v29 = vld [vmem:[%s0 + $0x18] sm:$0xff]
  %v30 = vld [vmem:[%s0 + $0x20] sm:$0xff]
  %v31 = vld [vmem:[%s0 + $0x28] sm:$0xff]
  %v32 = vld [vmem:[%s0 + $0x30] sm:$0xff]
  %v33 = vld [vmem:[%s0 + $0x38] sm:$0xff]
  %v34 = vld [vmem:[%s2] sm:$0xff]
  %v35 = vld [vmem:[%s2 + $0x8] sm:$0xff]
  %v36 = vld [vmem:[%s2 + $0x10] sm:$0xff]
  %v37 = vld [vmem:[%s2 + $0x18] sm:$0xff]
  %v38 = vld [vmem:[%s2 + $0x20] sm:$0xff]
  %v39 = vld [vmem:[%s2 + $0x28] sm:$0xff]
  %v40 = vld [vmem:[%s2 + $0x30] sm:$0xff]
  %v41 = vld [vmem:[%s2 + $0x38] sm:$0xff]
  %v42 = vld [vmem:[%s2 + $0x40] sm:$0xff]
  %v43 = vld [vmem:[%s2 + $0x48] sm:$0xff]
  %v44 = vld [vmem:[%s2 + $0x50] sm:$0xff]
  %v45 = vld [vmem:[%s2 + $0x58] sm:$0xff]
  %v46 = vld [vmem:[%s2 + $0x60] sm:$0xff]
  %v47 = vld [vmem:[%s2 + $0x68] sm:$0xff]
  %v48 = vld [vmem:[%s2 + $0x70] sm:$0xff]
  %v49 = vld [vmem:[%s2 + $0x78] sm:$0xff]
  %v50 = vld [vmem:[%s4] sm:$0x1]
  %v52 = vperm.slane %v50, 0
  %54 = vmatpush.msra.mxu0 %v49
  %55 = vmatpush.msra.mxu0 %v48
  %56 = vmatpush.msra.mxu0 %v47
  %57 = vmatpush.msra.mxu0 %v46
  %58 = vmatpush.msra.mxu0 %v45
  %59 = vmatpush.msra.mxu0 %v44
  %60 = vmatpush.msra.mxu0 %v43
  %61 = vmatpush.msra.mxu0 %v42
  %62 = vmatpush.msra.mxu0 %v41
  %63 = vmatpush.msra.mxu0 %v40
  %64 = vmatpush.msra.mxu0 %v39
  %65 = vmatpush.msra.mxu0 %v38
  %66 = vmatpush.msra.mxu0 %v37
  %67 = vmatpush.msra.mxu0 %v36
  %68 = vmatpush.msra.mxu0 %v35
  %69 = vmatpush.msra.mxu0 %v34
  %70 = vmatmul.f32.gmra.mxu0 %v26
  %v71 = vpop.f32.mrf.mxu0
  %v72 = vadd.f32 %v52, %v71
  %73 = vmatmul.f32.gmra.mxu0 %v27
  %v74 = vpop.f32.mrf.mxu0
  %v75 = vadd.f32 %v52, %v74
  %76 = vmatmul.f32.gmra.mxu0 %v28
  %v77 = vpop.f32.mrf.mxu0
  %v78 = vadd.f32 %v52, %v77
  %79 = vmatmul.f32.gmra.mxu0 %v29
  %v80 = vpop.f32.mrf.mxu0
  %v81 = vadd.f32 %v52, %v80
  %82 = vmatmul.f32.gmra.mxu0 %v30
  %v83 = vpop.f32.mrf.mxu0
  %v84 = vadd.f32 %v52, %v83
  %85 = vmatmul.f32.gmra.mxu0 %v31
  %v86 = vpop.f32.mrf.mxu0
  %v87 = vadd.f32 %v52, %v86
  %88 = vmatmul.f32.gmra.mxu0 %v32
  %v89 = vpop.f32.mrf.mxu0
  %v90 = vadd.f32 %v52, %v89
  %91 = vmatmul.f32.gmra.mxu0 %v33
  %v92 = vpop.f32.mrf.mxu0
  %v93 = vadd.f32 %v52, %v92
  %94 = vdwg.mxu0
  %95 = vst [vmem:[#allocation2] sm:$0xff] %v72
  %96 = vst [vmem:[#allocation2 + $0x8] sm:$0xff] %v75
  %97 = vst [vmem:[#allocation2 + $0x10] sm:$0xff] %v78
  %98 = vst [vmem:[#allocation2 + $0x18] sm:$0xff] %v81
  %99 = vst [vmem:[#allocation2 + $0x20] sm:$0xff] %v84
  %100 = vst [vmem:[#allocation2 + $0x28] sm:$0xff] %v87
  %101 = vst [vmem:[#allocation2 + $0x30] sm:$0xff] %v90
  %102 = vst [vmem:[#allocation2 + $0x38] sm:$0xff] %v93
  %v103 = vld [vmem:[%s3] sm:$0xff]
  %v104 = vld [vmem:[%s3 + $0x8] sm:$0xff]
  %v105 = vld [vmem:[%s3 + $0x10] sm:$0xff]
  %v106 = vld [vmem:[%s3 + $0x18] sm:$0xff]
  %v107 = vld [vmem:[%s3 + $0x20] sm:$0xff]
  %v108 = vld [vmem:[%s3 + $0x28] sm:$0xff]
  %v109 = vld [vmem:[%s3 + $0x30] sm:$0xff]
  %v110 = vld [vmem:[%s3 + $0x38] sm:$0xff]
  %v111 = vld [vmem:[%s3 + $0x40] sm:$0xff]
  %v112 = vld [vmem:[%s3 + $0x48] sm:$0xff]
  %v113 = vld [vmem:[%s3 + $0x50] sm:$0xff]
  %v114 = vld [vmem:[%s3 + $0x58] sm:$0xff]
  %v115 = vld [vmem:[%s3 + $0x60] sm:$0xff]
  %v116 = vld [vmem:[%s3 + $0x68] sm:$0xff]
  %v117 = vld [vmem:[%s3 + $0x70] sm:$0xff]
  %v118 = vld [vmem:[%s3 + $0x78] sm:$0xff]
  %v119 = vld [vmem:[%s1] sm:$0xff]
  %v120 = vld [vmem:[#allocation2] sm:$0xff]
  %121 = vmatpush.msra.mxu0 %v118
  %122 = vmatpush.msra.mxu0 %v117
  %123 = vmatpush.msra.mxu0 %v116
  %124 = vmatpush.msra.mxu0 %v115
  %125 = vmatpush.msra.mxu0 %v114
  %126 = vmatpush.msra.mxu0 %v113
  %127 = vmatpush.msra.mxu0 %v112
  %128 = vmatpush.msra.mxu0 %v111
  %129 = vmatpush.msra.mxu0 %v110
  %130 = vmatpush.msra.mxu0 %v109
  %131 = vmatpush.msra.mxu0 %v108
  %132 = vmatpush.msra.mxu0 %v107
  %133 = vmatpush.msra.mxu0 %v106
  %134 = vmatpush.msra.mxu0 %v105
  %135 = vmatpush.msra.mxu0 %v104
  %136 = vmatpush.msra.mxu0 %v103
  %137 = vmatmul.f32.gmra.mxu0 %v119
  %v138 = vpop.f32.mrf.mxu0
  %v139 = vadd.f32 0.0, %v138
  %140 = vdwg.mxu0
  %v141 = vadd.f32 %v120, %v139
  %v142 = vtanh.pop %v141
  %143 = vst [vmem:[#allocation3] sm:$0xff] %v142
  %s144 = scalar_lea.vmem [#allocation2], 8
  %v145 = vld [vmem:[%s144] sm:$0xff]
  %146 = vmatpush.msra.mxu0 %v118
  %147 = vmatpush.msra.mxu0 %v117
  %148 = vmatpush.msra.mxu0 %v116
  %149 = vmatpush.msra.mxu0 %v115
  %150 = vmatpush.msra.mxu0 %v114
  %151 = vmatpush.msra.mxu0 %v113
  %152 = vmatpush.msra.mxu0 %v112
  %153 = vmatpush.msra.mxu0 %v111
  %154 = vmatpush.msra.mxu0 %v110
  %155 = vmatpush.msra.mxu0 %v109
  %156 = vmatpush.msra.mxu0 %v108
  %157 = vmatpush.msra.mxu0 %v107
  %158 = vmatpush.msra.mxu0 %v106
  %159 = vmatpush.msra.mxu0 %v105
  %160 = vmatpush.msra.mxu0 %v104
  %161 = vmatpush.msra.mxu0 %v103
  %162 = vmatmul.f32.gmra.mxu0 %v142
  %v163 = vpop.f32.mrf.mxu0
  %v164 = vadd.f32 0.0, %v163
  %165 = vdwg.mxu0
  %v166 = vadd.f32 %v145, %v164
  %v167 = vtanh.pop %v166
  %s168 = scalar_lea.vmem [#allocation3], 8
  %169 = vst [vmem:[%s168] sm:$0xff] %v167
  %s170 = scalar_lea.vmem [#allocation2], 16
  %v171 = vld [vmem:[%s170] sm:$0xff]
  %172 = vmatpush.msra.mxu0 %v118
  %173 = vmatpush.msra.mxu0 %v117
  %174 = vmatpush.msra.mxu0 %v116
  %175 = vmatpush.msra.mxu0 %v115
  %176 = vmatpush.msra.mxu0 %v114
  %177 = vmatpush.msra.mxu0 %v113
  %178 = vmatpush.msra.mxu0 %v112
  %179 = vmatpush.msra.mxu0 %v111
  %180 = vmatpush.msra.mxu0 %v110
  %181 = vmatpush.msra.mxu0 %v109
  %182 = vmatpush.msra.mxu0 %v108
  %183 = vmatpush.msra.mxu0 %v107
  %184 = vmatpush.msra.mxu0 %v106
  %185 = vmatpush.msra.mxu0 %v105
  %186 = vmatpush.msra.mxu0 %v104
  %187 = vmatpush.msra.mxu0 %v103
  %188 = vmatmul.f32.gmra.mxu0 %v167
  %v189 = vpop.f32.mrf.mxu0
  %v190 = vadd.f32 0.0, %v189
  %191 = vdwg.mxu0
  %v192 = vadd.f32 %v171, %v190
  %v193 = vtanh.pop %v192
  %s194 = scalar_lea.vmem [#allocation3], 16
  %195 = vst [vmem:[%s194] sm:$0xff] %v193
  %s196 = scalar_lea.vmem [#allocation2], 24
  %v197 = vld [vmem:[%s196] sm:$0xff]
  %198 = vmatpush.msra.mxu0 %v118
  %199 = vmatpush.msra.mxu0 %v117
  %200 = vmatpush.msra.mxu0 %v116
  %201 = vmatpush.msra.mxu0 %v115
  %202 = vmatpush.msra.mxu0 %v114
  %203 = vmatpush.msra.mxu0 %v113
  %204 = vmatpush.msra.mxu0 %v112
  %205 = vmatpush.msra.mxu0 %v111
  %206 = vmatpush.msra.mxu0 %v110
  %207 = vmatpush.msra.mxu0 %v109
  %208 = vmatpush.msra.mxu0 %v108
  %209 = vmatpush.msra.mxu0 %v107
  %210 = vmatpush.msra.mxu0 %v106
  %211 = vmatpush.msra.mxu0 %v105
  %212 = vmatpush.msra.mxu0 %v104
  %213 = vmatpush.msra.mxu0 %v103
  %214 = vmatmul.f32.gmra.mxu0 %v193
  %v215 = vpop.f32.mrf.mxu0
  %v216 = vadd.f32 0.0, %v215
  %217 = vdwg.mxu0
  %v218 = vadd.f32 %v197, %v216
  %v219 = vtanh.pop %v218
  %s220 = scalar_lea.vmem [#allocation3], 24
  %221 = vst [vmem:[%s220] sm:$0xff] %v219
  %s222 = scalar_lea.vmem [#allocation2], 32
  %v223 = vld [vmem:[%s222] sm:$0xff]
  %224 = vmatpush.msra.mxu0 %v118
  %225 = vmatpush.msra.mxu0 %v117
  %226 = vmatpush.msra.mxu0 %v116
  %227 = vmatpush.msra.mxu0 %v115
  %228 = vmatpush.msra.mxu0 %v114
  %229 = vmatpush.msra.mxu0 %v113
  %230 = vmatpush.msra.mxu0 %v112
  %231 = vmatpush.msra.mxu0 %v111
  %232 = vmatpush.msra.mxu0 %v110
  %233 = vmatpush.msra.mxu0 %v109
  %234 = vmatpush.msra.mxu0 %v108
  %235 = vmatpush.msra.mxu0 %v107
  %236 = vmatpush.msra.mxu0 %v106
  %237 = vmatpush.msra.mxu0 %v105
  %238 = vmatpush.msra.mxu0 %v104
  %239 = vmatpush.msra.mxu0 %v103
  %240 = vmatmul.f32.gmra.mxu0 %v219
  %v241 = vpop.f32.mrf.mxu0
  %v242 = vadd.f32 0.0, %v241
  %243 = vdwg.mxu0
  %v244 = vadd.f32 %v223, %v242
  %v245 = vtanh.pop %v244
  %s246 = scalar_lea.vmem [#allocation3], 32
  %247 = vst [vmem:[%s246] sm:$0xff] %v245
  %s248 = scalar_lea.vmem [#allocation2], 40
  %v249 = vld [vmem:[%s248] sm:$0xff]
  %250 = vmatpush.msra.mxu0 %v118
  %251 = vmatpush.msra.mxu0 %v117
  %252 = vmatpush.msra.mxu0 %v116
  %253 = vmatpush.msra.mxu0 %v115
  %254 = vmatpush.msra.mxu0 %v114
  %255 = vmatpush.msra.mxu0 %v113
  %256 = vmatpush.msra.mxu0 %v112
  %257 = vmatpush.msra.mxu0 %v111
  %258 = vmatpush.msra.mxu0 %v110
  %259 = vmatpush.msra.mxu0 %v109
  %260 = vmatpush.msra.mxu0 %v108
  %261 = vmatpush.msra.mxu0 %v107
  %262 = vmatpush.msra.mxu0 %v106
  %263 = vmatpush.msra.mxu0 %v105
  %264 = vmatpush.msra.mxu0 %v104
  %265 = vmatpush.msra.mxu0 %v103
  %266 = vmatmul.f32.gmra.mxu0 %v245
  %v267 = vpop.f32.mrf.mxu0
  %v268 = vadd.f32 0.0, %v267
  %269 = vdwg.mxu0
  %v270 = vadd.f32 %v249, %v268
  %v271 = vtanh.pop %v270
  %s272 = scalar_lea.vmem [#allocation3], 40
  %273 = vst [vmem:[%s272] sm:$0xff] %v271
  %s274 = scalar_lea.vmem [#allocation2], 48
  %v275 = vld [vmem:[%s274] sm:$0xff]
  %276 = vmatpush.msra.mxu0 %v118
  %277 = vmatpush.msra.mxu0 %v117
  %278 = vmatpush.msra.mxu0 %v116
  %279 = vmatpush.msra.mxu0 %v115
  %280 = vmatpush.msra.mxu0 %v114
  %281 = vmatpush.msra.mxu0 %v113
  %282 = vmatpush.msra.mxu0 %v112
  %283 = vmatpush.msra.mxu0 %v111
  %284 = vmatpush.msra.mxu0 %v110
  %285 = vmatpush.msra.mxu0 %v109
  %286 = vmatpush.msra.mxu0 %v108
  %287 = vmatpush.msra.mxu0 %v107
  %288 = vmatpush.msra.mxu0 %v106
  %289 = vmatpush.msra.mxu0 %v105
  %290 = vmatpush.msra.mxu0 %v104
  %291 = vmatpush.msra.mxu0 %v103
  %292 = vmatmul.f32.gmra.mxu0 %v271
  %v293 = vpop.f32.mrf.mxu0
  %v294 = vadd.f32 0.0, %v293
  %295 = vdwg.mxu0
  %v296 = vadd.f32 %v275, %v294
  %v297 = vtanh.pop %v296
  %s298 = scalar_lea.vmem [#allocation3], 48
  %299 = vst [vmem:[%s298] sm:$0xff] %v297
  %s300 = scalar_lea.vmem [#allocation2], 56
  %v301 = vld [vmem:[%s300] sm:$0xff]
  %302 = vmatpush.msra.mxu0 %v118
  %303 = vmatpush.msra.mxu0 %v117
  %304 = vmatpush.msra.mxu0 %v116
  %305 = vmatpush.msra.mxu0 %v115
  %306 = vmatpush.msra.mxu0 %v114
  %307 = vmatpush.msra.mxu0 %v113
  %308 = vmatpush.msra.mxu0 %v112
  %309 = vmatpush.msra.mxu0 %v111
  %310 = vmatpush.msra.mxu0 %v110
  %311 = vmatpush.msra.mxu0 %v109
  %312 = vmatpush.msra.mxu0 %v108
  %313 = vmatpush.msra.mxu0 %v107
  %314 = vmatpush.msra.mxu0 %v106
  %315 = vmatpush.msra.mxu0 %v105
  %316 = vmatpush.msra.mxu0 %v104
  %317 = vmatpush.msra.mxu0 %v103
  %318 = vmatmul.f32.gmra.mxu0 %v297
  %v319 = vpop.f32.mrf.mxu0
  %v320 = vadd.f32 0.0, %v319
  %321 = vdwg.mxu0
  %v322 = vadd.f32 %v301, %v320
  %v323 = vtanh.pop %v322
  %s324 = scalar_lea.vmem [#allocation3], 56
  %325 = vst [vmem:[%s324] sm:$0xff] %v323
  %v326 = vld [vmem:[#allocation3] sm:$0xff]
  %v327 = vld [vmem:[#allocation3 + $0x8] sm:$0xff]
  %v328 = vld [vmem:[#allocation3 + $0x10] sm:$0xff]
  %v329 = vld [vmem:[#allocation3 + $0x18] sm:$0xff]
  %v330 = vld [vmem:[#allocation3 + $0x20] sm:$0xff]
  %v331 = vld [vmem:[#allocation3 + $0x28] sm:$0xff]
  %v332 = vld [vmem:[#allocation3 + $0x30] sm:$0xff]
  %v333 = vld [vmem:[#allocation3 + $0x38] sm:$0xff]
  %v334 = vld [vmem:[%s5] sm:$0xff]
  %v335 = vld [vmem:[%s5 + $0x8] sm:$0xff]
  %v336 = vld [vmem:[%s5 + $0x10] sm:$0xff]
  %v337 = vld [vmem:[%s5 + $0x18] sm:$0xff]
  %v338 = vld [vmem:[%s5 + $0x20] sm:$0xff]
  %v339 = vld [vmem:[%s5 + $0x28] sm:$0xff]
  %v340 = vld [vmem:[%s5 + $0x30] sm:$0xff]
  %v341 = vld [vmem:[%s5 + $0x38] sm:$0xff]
  %v342 = vld [vmem:[%s5 + $0x40] sm:$0xff]
  %v343 = vld [vmem:[%s5 + $0x48] sm:$0xff]
  %v344 = vld [vmem:[%s5 + $0x50] sm:$0xff]
  %v345 = vld [vmem:[%s5 + $0x58] sm:$0xff]
  %v346 = vld [vmem:[%s5 + $0x60] sm:$0xff]
  %v347 = vld [vmem:[%s5 + $0x68] sm:$0xff]
  %v348 = vld [vmem:[%s5 + $0x70] sm:$0xff]
  %v349 = vld [vmem:[%s5 + $0x78] sm:$0xff]
  %v350 = vld [vmem:[%s6] sm:$0x1]
  %v352 = vperm.slane %v350, 0
  %354 = vmatpush.msra.mxu0 %v349
  %355 = vmatpush.msra.mxu0 %v348
  %356 = vmatpush.msra.mxu0 %v347
  %357 = vmatpush.msra.mxu0 %v346
  %358 = vmatpush.msra.mxu0 %v345
  %359 = vmatpush.msra.mxu0 %v344
  %360 = vmatpush.msra.mxu0 %v343
  %361 = vmatpush.msra.mxu0 %v342
  %362 = vmatpush.msra.mxu0 %v341
  %363 = vmatpush.msra.mxu0 %v340
  %364 = vmatpush.msra.mxu0 %v339
  %365 = vmatpush.msra.mxu0 %v338
  %366 = vmatpush.msra.mxu0 %v337
  %367 = vmatpush.msra.mxu0 %v336
  %368 = vmatpush.msra.mxu0 %v335
  %369 = vmatpush.msra.mxu0 %v334
  %370 = vmatmul.f32.gmra.mxu0 %v326
  %v371 = vpop.f32.mrf.mxu0
  %v372 = vadd.f32 %v352, %v371
  %373 = vmatmul.f32.gmra.mxu0 %v327
  %v374 = vpop.f32.mrf.mxu0
  %v375 = vadd.f32 %v352, %v374
  %376 = vmatmul.f32.gmra.mxu0 %v328
  %v377 = vpop.f32.mrf.mxu0
  %v378 = vadd.f32 %v352, %v377
  %379 = vmatmul.f32.gmra.mxu0 %v329
  %v380 = vpop.f32.mrf.mxu0
  %v381 = vadd.f32 %v352, %v380
  %382 = vmatmul.f32.gmra.mxu0 %v330
  %v383 = vpop.f32.mrf.mxu0
  %v384 = vadd.f32 %v352, %v383
  %385 = vmatmul.f32.gmra.mxu0 %v331
  %v386 = vpop.f32.mrf.mxu0
  %v387 = vadd.f32 %v352, %v386
  %388 = vmatmul.f32.gmra.mxu0 %v332
  %v389 = vpop.f32.mrf.mxu0
  %v390 = vadd.f32 %v352, %v389
  %391 = vmatmul.f32.gmra.mxu0 %v333
  %v392 = vpop.f32.mrf.mxu0
  %v393 = vadd.f32 %v352, %v392
  %394 = vdwg.mxu0
  %395 = vst [vmem:[%s7] sm:$0xff] %v372
  %396 = vst [vmem:[%s7 + $0x8] sm:$0xff] %v375
  %397 = vst [vmem:[%s7 + $0x10] sm:$0xff] %v378
  %398 = vst [vmem:[%s7 + $0x18] sm:$0xff] %v381
  %399 = vst [vmem:[%s7 + $0x20] sm:$0xff] %v384
  %400 = vst [vmem:[%s7 + $0x28] sm:$0xff] %v387
  %401 = vst [vmem:[%s7 + $0x30] sm:$0xff] %v390
  %402 = vst [vmem:[%s7 + $0x38] sm:$0xff] %v393
  // Predicated region
  $region30: #{rnn_model_forward.1} parent=0 // pred_check
    _
  $region31: #{rnn_model_forward.1} parent=0 // pred_check_branch
    %404 = sbr.rel (0) target = $region33
  $region32: #{rnn_model_forward.1} parent=0 // pred_region
    _
  $region33: #{rnn_model_forward.1} parent=0 // pred_fallthru
    _
  // Predicated region
  $region34: #{rnn_model_forward.1} parent=0 // pred_check
    _
  $region35: #{rnn_model_forward.1} parent=0 // pred_check_branch
    %406 = sbr.rel (0) target = $region37
  $region36: #{rnn_model_forward.1} parent=0 // pred_region
    _
  $region37: #{rnn_model_forward.1} parent=0 // pred_fallthru
    _

</llo_original>
